<compile_context>
chip_gen: v6e
topology: v6e:2x2x1
jax: 0.10.0
libtpu: 0.0.40
codegen_flags: <defaults>
</compile_context>

<pallas_src>
import jax
import jax.numpy as jnp
import numpy as np
from jax import lax
from jax.experimental import pallas as pl
from jax.experimental.pallas import tpu as pltpu


_NEG_BIG = -1e30   # padded-vocab bias: never wins softmax / argmax
_SUBL = 8          # native sublane count; stats slab is (8, 128) per tile


# ----------------------------- fused loss (per tile) --------------------------

def _loss_stats_row(logits, tgt, mask_col):
    """compute_loss for one (TS, Vp) tile -> lane-dense (1, 128) stats row.

    lane 0: masked KL sum over the tile's rows
    lane 1: 1.0 iff argmax(logits)==argmax(tgt) on every unmasked row (acc)
    lane 2: 1.0 iff tgt[argmax(logits)] > 0 on every unmasked row (recall)
    """
    # log-softmax pieces; `m` is reused below for the prediction argmax.
    m = jnp.max(logits, axis=-1, keepdims=True)                     # (TS, 1)
    z = logits - m
    lse = jnp.log(jnp.sum(jnp.exp(z), axis=-1, keepdims=True))      # (TS, 1)

    # KLDivLoss(reduction='none') row sums without materializing logprobs:
    #   sum_v tgt*(log tgt - (z - lse)) = sum_v tgt*(log tgt - z) + lse*sum_v tgt
    pos = tgt > 0.0
    kl_main = jnp.sum(
        jnp.where(pos, tgt * (jnp.log(jnp.where(pos, tgt, 1.0)) - z), 0.0),
        axis=-1, keepdims=True)                                     # (TS, 1)
    tgt_sum = jnp.sum(tgt, axis=-1, keepdims=True)                  # (TS, 1)
    kl_row = kl_main + lse * tgt_sum
    kl_tile = jnp.sum(kl_row * mask_col, axis=0, keepdims=True)     # (1, 1)

    # first-occurrence argmax (matches torch .max(-1)[1]) via iota + min.
    vid = lax.broadcasted_iota(jnp.int32, logits.shape, 1)
    big = jnp.int32(2 ** 30)
    best_pred = jnp.min(jnp.where(logits == m, vid, big), axis=-1, keepdims=True)
    tmax = jnp.max(tgt, axis=-1, keepdims=True)
    best_gold = jnp.min(jnp.where(tgt == tmax, vid, big), axis=-1, keepdims=True)
    # gather tgt at best_pred via one-hot reduce (reuses the tgt tile already in VMEM)
    tgt_at_pred = jnp.sum(jnp.where(vid == best_pred, tgt, 0.0),
                          axis=-1, keepdims=True)                   # (TS, 1)

    unmasked = mask_col == 0.0
    same = jnp.logical_or(best_pred == best_gold, unmasked)
    hit = jnp.logical_or(tgt_at_pred > 0.0, unmasked)
    tile_acc = jnp.min(same.astype(jnp.float32), axis=0, keepdims=True)   # (1, 1)
    tile_rec = jnp.min(hit.astype(jnp.float32), axis=0, keepdims=True)    # (1, 1)

    lane = lax.broadcasted_iota(jnp.int32, (1, 128), 1)
    return jnp.where(lane == 0, kl_tile,
           jnp.where(lane == 1, tile_acc,
           jnp.where(lane == 2, tile_rec, 0.0)))                    # (1, 128)


# ----------------------------- Pallas kernels ---------------------------------

def _fused_kernel_resident(h_ref, w_ref, bias_ref, tgt_ref, mask_ref,
                           logits_ref, stats_ref):
    """grid = (batch, seq-tiles); whole-D matmul, W resident in VMEM."""
    logits = jnp.dot(h_ref[0], w_ref[...],
                     preferred_element_type=jnp.float32) + bias_ref[...]
    logits_ref[0] = logits.astype(logits_ref.dtype)
    row = _loss_stats_row(logits, tgt_ref[0], mask_ref[0])
    stats_ref[0, 0] = jnp.broadcast_to(row, (_SUBL, 128))


def _fused_kernel_ktiled(h_ref, w_ref, bias_ref, tgt_ref, mask_ref,
                         logits_ref, stats_ref, logit_acc):
    """grid = (batch, seq-tiles, hidden-K-tiles); fallback when W is too large
    for resident VMEM.  K is the innermost (reduction) axis."""
    ki = pl.program_id(2)
    n_k = pl.num_programs(2)

    part = jnp.dot(h_ref[0], w_ref[...], preferred_element_type=jnp.float32)

    @pl.when(ki == 0)
    def _():
        # bias folded into the first partial product: no zero-fill pass, and no
        # separate +bias pass in the epilogue.
        logit_acc[...] = part + bias_ref[...]

    @pl.when(ki > 0)
    def _():
        logit_acc[...] += part

    @pl.when(ki == n_k - 1)
    def _():
        logits = logit_acc[...]
        logits_ref[0] = logits.astype(logits_ref.dtype)
        row = _loss_stats_row(logits, tgt_ref[0], mask_ref[0])
        stats_ref[0, 0] = jnp.broadcast_to(row, (_SUBL, 128))


# ------------------------------- wrapper --------------------------------------

def _pick_tile(dim, candidates):
    for t in candidates:
        if t <= dim and dim % t == 0:
            return t
    return dim


def _vmem_cap_bytes():
    """Per-generation scoped-VMEM cap: physical capacity minus compiler headroom
    (~48 MiB on v7x's 64 MiB, ~112 MiB on v5e/v6e's 128 MiB)."""
    phys = 64 * 2 ** 20  # conservative default (v7x-sized) if the query fails
    try:
        phys = int(pltpu.get_tpu_info().vmem_capacity_bytes)
    except Exception:
        pass
    return max(32 * 2 ** 20, phys - 16 * 2 ** 20)


def seq_insertion_train_forward(tokens, tgt, tgtmask, params, *,
                                row_tile=None, k_tile=None,
                                use_bf16_matmul=True, logits_dtype=None):
    """Mirrors SeqInsertionDecoder.train_forward (fused tagger head + compute_loss).

    Returns ({'loss', 'acc', 'recall'} per batch row, logits (B, S, V)).

    # TODO(synk): extract_training_example / tagger.encode_source are abstract in
    # the reference module; inputs here are the already-extracted (newy, tgt, mask)
    # and the tagger is a synthetic embedding + linear head.
    """
    emb, w, bias = params["emb"], params["w"], params["b"]
    B, S = tokens.shape
    D = emb.shape[1]
    V = w.shape[1]

    mm_dtype = jnp.bfloat16 if use_bf16_matmul else jnp.float32
    out_dtype = logits_dtype if logits_dtype is not None else mm_dtype

    # Embedding gather; cast emb FIRST so the materialized h tensor is written /
    # read from HBM at matmul input width.
    # TODO(synk): move the gather in-kernel (tokens as scalar prefetch + Element
    # row indexing on emb) to avoid materializing h in HBM entirely.
    h = jnp.take(emb.astype(mm_dtype), tokens, axis=0)              # (B, S, D)

    # Lane-dense vocab: pad V up to a multiple of 128.  Padded weight columns
    # are 0, padded bias lanes are -1e30 (never win softmax/argmax), padded tgt
    # lanes are 0 (never contribute to KL).  Padded logit lanes are sliced off.
    Vp = max(128, ((V + 127) // 128) * 128)
    pad = Vp - V
    w_p = jnp.pad(w, ((0, 0), (0, pad))).astype(mm_dtype)            # (D, Vp)
    bias_p = jnp.pad(bias.astype(jnp.float32), (0, pad),
                     constant_values=_NEG_BIG).reshape(1, Vp)        # (1, Vp)
    tgt_p = jnp.pad(tgt[:, :S].astype(jnp.float32),
                    ((0, 0), (0, 0), (0, pad)))                      # (B, S, Vp)
    # mask kept as a (B, S, 1) column (lane dim == full dim); cheap either way.
    mask_col = tgtmask[:, :S, None].astype(jnp.float32)

    # ---- tile plan + generation-aware VMEM budget ----
    TS = row_tile if row_tile is not None else _pick_tile(S, (256, 128, 64, 32, 16, 8))
    assert S % TS == 0, "row tile must divide S"
    n_s = S // TS

    eb_in = 2 if use_bf16_matmul else 4
    eb_out = jnp.dtype(out_dtype).itemsize
    cap = _vmem_cap_bytes()

    def plan_bytes(tk, k_tiled):
        f32 = 4
        dbl = 2 * (TS * tk * eb_in          # h block
                   + tk * Vp * eb_in        # w block
                   + Vp * f32               # bias
                   + TS * Vp * f32          # tgt block
                   + TS * 128 * f32         # mask block (lane-padded estimate)
                   + TS * Vp * eb_out       # logits out block
                   + _SUBL * 128 * f32)     # stats out block
        return dbl + (TS * Vp * f32 if k_tiled else 0)   # f32 logits accumulator

    if k_tile is not None:
        TK = k_tile
    elif plan_bytes(D, False) + (4 << 20) <= cap:
        TK = D                              # W resident: loaded from HBM exactly once
    else:
        TK = _pick_tile(D, tuple(t for t in (512, 256, 128) if t < D))
    assert D % TK == 0, "k tile must divide D"
    k_steps = D // TK

    vmem_limit = int(min(cap, max(16 << 20, plan_bytes(TK, k_steps > 1) + (4 << 20))))

    # ---- grid / specs ----
    if k_steps == 1:
        grid = (B, n_s)
        in_specs = [
            pl.BlockSpec((1, TS, D), lambda bi, si: (bi, si, 0)),     # h
            pl.BlockSpec((D, Vp), lambda bi, si: (0, 0)),             # w (resident)
            pl.BlockSpec((1, Vp), lambda bi, si: (0, 0)),             # bias
            pl.BlockSpec((1, TS, Vp), lambda bi, si: (bi, si, 0)),    # tgt
            pl.BlockSpec((1, TS, 1), lambda bi, si: (bi, si, 0)),     # mask
        ]
        out_specs = (
            pl.BlockSpec((1, TS, Vp), lambda bi, si: (bi, si, 0)),            # logits
            pl.BlockSpec((1, 1, _SUBL, 128), lambda bi, si: (bi, si, 0, 0)),  # stats
        )
        scratch_shapes = ()
        kernel = _fused_kernel_resident
        semantics = ("parallel", "parallel")
    else:
        grid = (B, n_s, k_steps)
        in_specs = [
            pl.BlockSpec((1, TS, TK), lambda bi, si, ki: (bi, si, ki)),
            pl.BlockSpec((TK, Vp), lambda bi, si, ki: (ki, 0)),
            pl.BlockSpec((1, Vp), lambda bi, si, ki: (0, 0)),
            pl.BlockSpec((1, TS, Vp), lambda bi, si, ki: (bi, si, 0)),
            pl.BlockSpec((1, TS, 1), lambda bi, si, ki: (bi, si, 0)),
        ]
        out_specs = (
            pl.BlockSpec((1, TS, Vp), lambda bi, si, ki: (bi, si, 0)),
            pl.BlockSpec((1, 1, _SUBL, 128), lambda bi, si, ki: (bi, si, 0, 0)),
        )
        scratch_shapes = (pltpu.VMEM((TS, Vp), jnp.float32),)   # K-axis accumulator
        kernel = _fused_kernel_ktiled
        semantics = ("parallel", "parallel", "arbitrary")

    logits_p, stats = pl.pallas_call(
        kernel,
        grid_spec=pltpu.PrefetchScalarGridSpec(
            num_scalar_prefetch=0,
            grid=grid,
            in_specs=in_specs,
            out_specs=out_specs,
            scratch_shapes=scratch_shapes,
        ),
        out_shape=(
            jax.ShapeDtypeStruct((B, S, Vp), out_dtype),
            jax.ShapeDtypeStruct((B, n_s, _SUBL, 128), jnp.float32),
        ),
        compiler_params=pltpu.CompilerParams(
            dimension_semantics=semantics,
            vmem_limit_bytes=vmem_limit,
        ),
    )(h, w_p, bias_p, tgt_p, mask_col)

    logits = logits_p[:, :, :V] if pad else logits_p
    # tiny host-side reduction over the per-tile stats (enables the fully
    # parallel grid; kl adds, acc/recall are per-tile "all" flags -> min).
    out = {
        "loss": jnp.sum(stats[:, :, 0, 0], axis=1),
        "acc": jnp.min(stats[:, :, 0, 1], axis=1),
        "recall": jnp.min(stats[:, :, 0, 2], axis=1),
    }
    return out, logits

# TODO(synk): test_forward / get_prediction (greedy Python insertion loop + lisp
# tree parsing / tree equality) is host-side string processing with no Pallas
# equivalent; not implemented.


# --------------------------------- main ---------------------------------------

if __name__ == "__main__":
    B, S, V, D = 2, 16, 32, 256          # batch, seq, vocab, hidden

    key = jax.random.PRNGKey(0)
    k1, k2, k3, k4, k5, k6 = jax.random.split(key, 6)

    # deterministic synthetic parameters (tagger)
    emb = jax.random.normal(k1, (V, D), jnp.float32) * 0.1
    w = jax.random.normal(k2, (D, V), jnp.float32) * 0.1
    b = jax.random.normal(k3, (V,), jnp.float32) * 0.01
    params = {"emb": emb, "w": w, "b": b}

    # inputs: token ids (newy), sparse target distributions (tgt), mask
    tokens = jax.random.randint(k4, (B, S), 0, V)
    raw = jax.random.uniform(k5, (B, S + 1, V))
    raw = jnp.where(raw > 0.7, raw, 0.0)                 # exact zeros exercise KL masking
    gold_ids = jax.random.randint(k6, (B, S + 1), 0, V)
    raw = raw + jax.nn.one_hot(gold_ids, V, dtype=jnp.float32)
    tgt = raw / jnp.sum(raw, axis=-1, keepdims=True)
    tgtmask = jnp.ones((B, S + 1), jnp.float32).at[:, -2:].set(0.0)

    # pure-JAX reference
    ref_logits = jnp.take(emb, tokens, axis=0) @ w + b
    lp = jax.nn.log_softmax(ref_logits, -1)
    t, mm = tgt[:, :-1], tgtmask[:, :-1]
    kl_ref = jnp.where(t > 0, t * (jnp.log(jnp.where(t > 0, t, 1.0)) - lp), 0.0).sum(-1)
    kl_ref = (kl_ref * mm).sum(-1)
    bp = jnp.argmax(ref_logits, -1)
    bg = jnp.argmax(t, -1)
    acc_ref = jnp.all((bp == bg) | (mm == 0), -1).astype(jnp.float32)
    tp = jnp.take_along_axis(t, bp[..., None], -1)[..., 0]
    rec_ref = jnp.all((tp > 0) | (mm == 0), -1).astype(jnp.float32)

    # 1) f32 matmul path, W resident (TK = D): tight check.
    out, logits = seq_insertion_train_forward(tokens, tgt, tgtmask, params,
                                              use_bf16_matmul=False)
    jax.block_until_ready((out, logits))
    np.testing.assert_allclose(np.asarray(logits), np.asarray(ref_logits),
                               rtol=1e-4, atol=1e-5)
    np.testing.assert_allclose(np.asarray(out["loss"]), np.asarray(kl_ref),
                               rtol=1e-4, atol=1e-4)
    np.testing.assert_allclose(np.asarray(out["acc"]), np.asarray(acc_ref))
    np.testing.assert_allclose(np.asarray(out["recall"]), np.asarray(rec_ref))

    # 2) f32 matmul path, K-tiled fallback + multiple S tiles: tight check.
    out2, logits2 = seq_insertion_train_forward(tokens, tgt, tgtmask, params,
                                                use_bf16_matmul=False,
                                                row_tile=8, k_tile=128)
    jax.block_until_ready((out2, logits2))
    np.testing.assert_allclose(np.asarray(logits2), np.asarray(ref_logits),
                               rtol=1e-4, atol=1e-5)
    np.testing.assert_allclose(np.asarray(out2["loss"]), np.asarray(kl_ref),
                               rtol=1e-4, atol=1e-4)
    np.testing.assert_allclose(np.asarray(out2["acc"]), np.asarray(acc_ref))
    np.testing.assert_allclose(np.asarray(out2["recall"]), np.asarray(rec_ref))

    # 3) production default: bf16 MXU inputs + bf16 logits out (f32 accumulation).
    #    Only the loss is checked loosely; near-tie argmax flips can make
    #    acc/recall differ from the f32 reference with bf16 logits.
    out3, logits3 = seq_insertion_train_forward(tokens, tgt, tgtmask, params)
    jax.block_until_ready((out3, logits3))
    np.testing.assert_allclose(np.asarray(out3["loss"]), np.asarray(kl_ref),
                               rtol=5e-2, atol=5e-2)

    print("KERNEL_OK")
</pallas_src>

<mosaic_0001>
module attributes {stable_mosaic.version = 11 : i64} {
  func.func @_fused_kernel_resident(%arg0: i32, %arg1: i32, %arg2: memref<1x16x256xf32, #tpu.memory_space<vmem>>, %arg3: memref<256x128xf32, #tpu.memory_space<vmem>>, %arg4: memref<1x128xf32, #tpu.memory_space<vmem>>, %arg5: memref<1x16x128xf32, #tpu.memory_space<vmem>>, %arg6: memref<1x16x1xf32, #tpu.memory_space<vmem>>, %arg7: memref<1x16x128xf32, #tpu.memory_space<vmem>>, %arg8: memref<1x1x8x128xf32, #tpu.memory_space<vmem>>) attributes {dimension_semantics = [#tpu.dimension_semantics<parallel>, #tpu.dimension_semantics<parallel>], iteration_bounds = array<i64: 2, 1>, scalar_prefetch = 0 : i64, scratch_operands = 0 : i64, tpu.core_type = #tpu.core_type<tc>, window_params = [{transform_indices = @transform_0, window_bounds = array<i64: 1, 16, 256>}, {pipeline_mode = #tpu.pipeline_mode<synchronous>, transform_indices = @transform_1, window_bounds = array<i64: 256, 128>}, {pipeline_mode = #tpu.pipeline_mode<synchronous>, transform_indices = @transform_2, window_bounds = array<i64: 1, 128>}, {transform_indices = @transform_3, window_bounds = array<i64: 1, 16, 128>}, {transform_indices = @transform_4, window_bounds = array<i64: 1, 16, 1>}, {transform_indices = @transform_5, window_bounds = array<i64: 1, 16, 128>}, {transform_indices = @transform_6, window_bounds = array<i64: 1, 1, 8, 128>}]} {
    %c0 = arith.constant 0 : index
    %c0_0 = arith.constant 0 : index
    %c0_1 = arith.constant 0 : index
    %0 = vector.load %arg2[%c0, %c0_0, %c0_1] : memref<1x16x256xf32, #tpu.memory_space<vmem>>, vector<1x16x256xf32>
    %1 = vector.shape_cast %0 : vector<1x16x256xf32> to vector<16x256xf32>
    %c0_2 = arith.constant 0 : index
    %c0_3 = arith.constant 0 : index
    %2 = vector.load %arg3[%c0_2, %c0_3] : memref<256x128xf32, #tpu.memory_space<vmem>>, vector<256x128xf32>
    %cst = arith.constant dense<0.000000e+00> : vector<16x128xf32>
    %3 = tpu.matmul %1, %2, %cst {dimension_numbers = #tpu.dot_dimension_numbers<[1], [0], [0], [1], [0, 0, 1, 1], [], []>} : vector<16x256xf32>, vector<256x128xf32>, vector<16x128xf32> -> vector<16x128xf32>
    %c0_4 = arith.constant 0 : index
    %c0_5 = arith.constant 0 : index
    %4 = vector.load %arg4[%c0_4, %c0_5] : memref<1x128xf32, #tpu.memory_space<vmem>>, vector<1x128xf32>
    %5 = vector.broadcast %4 : vector<1x128xf32> to vector<16x128xf32>
    %6 = arith.addf %3, %5 : vector<16x128xf32>
    %c0_6 = arith.constant 0 : index
    %c0_7 = arith.constant 0 : index
    %c0_8 = arith.constant 0 : index
    %7 = vector.load %arg7[%c0_6, %c0_7, %c0_8] : memref<1x16x128xf32, #tpu.memory_space<vmem>>, vector<1x16x128xf32>
    %8 = vector.shape_cast %7 : vector<1x16x128xf32> to vector<16x128xf32>
    %9 = vector.shape_cast %6 : vector<16x128xf32> to vector<1x16x128xf32>
    tpu.vector_store %arg7[%c0_6, %c0_7, %c0_8], %9 {strides = array<i32>} : memref<1x16x128xf32, #tpu.memory_space<vmem>>, vector<1x16x128xf32>,
    %c0_9 = arith.constant 0 : index
    %c0_10 = arith.constant 0 : index
    %c0_11 = arith.constant 0 : index
    %10 = vector.load %arg5[%c0_9, %c0_10, %c0_11] : memref<1x16x128xf32, #tpu.memory_space<vmem>>, vector<1x16x128xf32>
    %11 = vector.shape_cast %10 : vector<1x16x128xf32> to vector<16x128xf32>
    %c0_12 = arith.constant 0 : index
    %c0_13 = arith.constant 0 : index
    %c0_14 = arith.constant 0 : index
    %12 = vector.load %arg6[%c0_12, %c0_13, %c0_14] : memref<1x16x1xf32, #tpu.memory_space<vmem>>, vector<1x16x1xf32>
    %13 = vector.shape_cast %12 : vector<1x16x1xf32> to vector<16x1xf32>
    %cst_15 = arith.constant dense<0xFF800000> : vector<16xf32>
    %14 = vector.multi_reduction <maximumf>, %6, %cst_15 [1] : vector<16x128xf32> to vector<16xf32>
    %15 = vector.shape_cast %14 : vector<16xf32> to vector<16x1xf32>
    %16 = vector.broadcast %15 : vector<16x1xf32> to vector<16x128xf32>
    %17 = arith.subf %6, %16 : vector<16x128xf32>
    %18 = math.exp %17 : vector<16x128xf32>
    %cst_16 = arith.constant dense<0.000000e+00> : vector<16xf32>
    %19 = vector.multi_reduction <add>, %18, %cst_16 [1] : vector<16x128xf32> to vector<16xf32>
    %20 = vector.shape_cast %19 : vector<16xf32> to vector<16x1xf32>
    %21 = math.log %20 : vector<16x1xf32>
    %cst_17 = arith.constant 0.000000e+00 : f32
    %22 = vector.broadcast %cst_17 : f32 to vector<16x128xf32>
    %23 = arith.cmpf ogt, %11, %22 : vector<16x128xf32>
    %cst_18 = arith.constant 1.000000e+00 : f32
    %24 = vector.broadcast %cst_18 : f32 to vector<16x128xf32>
    %25 = arith.select %23, %11, %24 : vector<16x128xi1>, vector<16x128xf32>
    %26 = math.log %25 : vector<16x128xf32>
    %27 = arith.subf %26, %17 : vector<16x128xf32>
    %28 = arith.mulf %11, %27 : vector<16x128xf32>
    %cst_19 = arith.constant 0.000000e+00 : f32
    %29 = vector.broadcast %cst_19 : f32 to vector<16x128xf32>
    %30 = arith.select %23, %28, %29 : vector<16x128xi1>, vector<16x128xf32>
    %cst_20 = arith.constant dense<0.000000e+00> : vector<16xf32>
    %31 = vector.multi_reduction <add>, %30, %cst_20 [1] : vector<16x128xf32> to vector<16xf32>
    %32 = vector.shape_cast %31 : vector<16xf32> to vector<16x1xf32>
    %cst_21 = arith.constant dense<0.000000e+00> : vector<16xf32>
    %33 = vector.multi_reduction <add>, %11, %cst_21 [1] : vector<16x128xf32> to vector<16xf32>
    %34 = vector.shape_cast %33 : vector<16xf32> to vector<16x1xf32>
    %35 = arith.mulf %21, %34 : vector<16x1xf32>
    %36 = arith.addf %32, %35 : vector<16x1xf32>
    %37 = arith.mulf %36, %13 : vector<16x1xf32>
    %cst_22 = arith.constant dense<0.000000e+00> : vector<1xf32>
    %38 = vector.multi_reduction <add>, %37, %cst_22 [0] : vector<16x1xf32> to vector<1xf32>
    %39 = vector.shape_cast %38 : vector<1xf32> to vector<1x1xf32>
    %40 = tpu.iota {dimensions = array<i32: 1>} : vector<16x128xi32>
    %41 = vector.broadcast %15 : vector<16x1xf32> to vector<16x128xf32>
    %42 = arith.cmpf oeq, %6, %41 : vector<16x128xf32>
    %c1073741824_i32 = arith.constant 1073741824 : i32
    %43 = vector.broadcast %c1073741824_i32 : i32 to vector<16x128xi32>
    %44 = arith.select %42, %40, %43 : vector<16x128xi1>, vector<16x128xi32>
    %cst_23 = arith.constant dense<2147483647> : vector<16xi32>
    %45 = vector.multi_reduction <minsi>, %44, %cst_23 [1] : vector<16x128xi32> to vector<16xi32>
    %46 = vector.shape_cast %45 : vector<16xi32> to vector<16x1xi32>
    %cst_24 = arith.constant dense<0xFF800000> : vector<16xf32>
    %47 = vector.multi_reduction <maximumf>, %11, %cst_24 [1] : vector<16x128xf32> to vector<16xf32>
    %48 = vector.shape_cast %47 : vector<16xf32> to vector<16x1xf32>
    %49 = vector.broadcast %48 : vector<16x1xf32> to vector<16x128xf32>
    %50 = arith.cmpf oeq, %11, %49 : vector<16x128xf32>
    %c1073741824_i32_25 = arith.constant 1073741824 : i32
    %51 = vector.broadcast %c1073741824_i32_25 : i32 to vector<16x128xi32>
    %52 = arith.select %50, %40, %51 : vector<16x128xi1>, vector<16x128xi32>
    %cst_26 = arith.constant dense<2147483647> : vector<16xi32>
    %53 = vector.multi_reduction <minsi>, %52, %cst_26 [1] : vector<16x128xi32> to vector<16xi32>
    %54 = vector.shape_cast %53 : vector<16xi32> to vector<16x1xi32>
    %55 = vector.broadcast %46 : vector<16x1xi32> to vector<16x128xi32>
    %56 = arith.cmpi eq, %40, %55 : vector<16x128xi32>
    %cst_27 = arith.constant 0.000000e+00 : f32
    %57 = vector.broadcast %cst_27 : f32 to vector<16x128xf32>
    %58 = arith.select %56, %11, %57 : vector<16x128xi1>, vector<16x128xf32>
    %cst_28 = arith.constant dense<0.000000e+00> : vector<16xf32>
    %59 = vector.multi_reduction <add>, %58, %cst_28 [1] : vector<16x128xf32> to vector<16xf32>
    %60 = vector.shape_cast %59 : vector<16xf32> to vector<16x1xf32>
    %cst_29 = arith.constant 0.000000e+00 : f32
    %61 = vector.broadcast %cst_29 : f32 to vector<16x1xf32>
    %62 = arith.cmpf oeq, %13, %61 : vector<16x1xf32>
    %63 = arith.cmpi eq, %46, %54 : vector<16x1xi32>
    %64 = arith.ori %63, %62 : vector<16x1xi1>
    %cst_30 = arith.constant 0.000000e+00 : f32
    %65 = vector.broadcast %cst_30 : f32 to vector<16x1xf32>
    %66 = arith.cmpf ogt, %60, %65 : vector<16x1xf32>
    %67 = arith.ori %66, %62 : vector<16x1xi1>
    %68 = arith.extui %64 : vector<16x1xi1> to vector<16x1xi32>
    %69 = arith.sitofp %68 : vector<16x1xi32> to vector<16x1xf32>
    %cst_31 = arith.constant dense<0x7F800000> : vector<1xf32>
    %70 = vector.multi_reduction <minimumf>, %69, %cst_31 [0] : vector<16x1xf32> to vector<1xf32>
    %71 = vector.shape_cast %70 : vector<1xf32> to vector<1x1xf32>
    %72 = arith.extui %67 : vector<16x1xi1> to vector<16x1xi32>
    %73 = arith.sitofp %72 : vector<16x1xi32> to vector<16x1xf32>
    %cst_32 = arith.constant dense<0x7F800000> : vector<1xf32>
    %74 = vector.multi_reduction <minimumf>, %73, %cst_32 [0] : vector<16x1xf32> to vector<1xf32>
    %75 = vector.shape_cast %74 : vector<1xf32> to vector<1x1xf32>
    %76 = tpu.iota {dimensions = array<i32: 1>} : vector<1x128xi32>
    %c0_i32 = arith.constant 0 : i32
    %77 = vector.broadcast %c0_i32 : i32 to vector<1x128xi32>
    %78 = arith.cmpi eq, %76, %77 : vector<1x128xi32>
    %c1_i32 = arith.constant 1 : i32
    %79 = vector.broadcast %c1_i32 : i32 to vector<1x128xi32>
    %80 = arith.cmpi eq, %76, %79 : vector<1x128xi32>
    %c2_i32 = arith.constant 2 : i32
    %81 = vector.broadcast %c2_i32 : i32 to vector<1x128xi32>
    %82 = arith.cmpi eq, %76, %81 : vector<1x128xi32>
    %cst_33 = arith.constant 0.000000e+00 : f32
    %83 = vector.shape_cast %75 : vector<1x1xf32> to vector<1x1xf32>
    %84 = vector.broadcast %83 : vector<1x1xf32> to vector<1x128xf32>
    %85 = vector.broadcast %cst_33 : f32 to vector<1x128xf32>
    %86 = arith.select %82, %84, %85 : vector<1x128xi1>, vector<1x128xf32>
    %87 = vector.shape_cast %71 : vector<1x1xf32> to vector<1x1xf32>
    %88 = vector.broadcast %87 : vector<1x1xf32> to vector<1x128xf32>
    %89 = arith.select %80, %88, %86 : vector<1x128xi1>, vector<1x128xf32>
    %90 = vector.shape_cast %39 : vector<1x1xf32> to vector<1x1xf32>
    %91 = vector.broadcast %90 : vector<1x1xf32> to vector<1x128xf32>
    %92 = arith.select %78, %91, %89 : vector<1x128xi1>, vector<1x128xf32>
    %93 = vector.shape_cast %92 : vector<1x128xf32> to vector<1x128xf32>
    %94 = vector.broadcast %93 : vector<1x128xf32> to vector<8x128xf32>
    %c0_34 = arith.constant 0 : index
    %c0_35 = arith.constant 0 : index
    %c0_36 = arith.constant 0 : index
    %c0_37 = arith.constant 0 : index
    %95 = vector.load %arg8[%c0_34, %c0_35, %c0_36, %c0_37] : memref<1x1x8x128xf32, #tpu.memory_space<vmem>>, vector<1x1x8x128xf32>
    %96 = vector.shape_cast %95 : vector<1x1x8x128xf32> to vector<8x128xf32>
    %97 = vector.shape_cast %94 : vector<8x128xf32> to vector<1x1x8x128xf32>
    tpu.vector_store %arg8[%c0_34, %c0_35, %c0_36, %c0_37], %97 {strides = array<i32>} : memref<1x1x8x128xf32, #tpu.memory_space<vmem>>, vector<1x1x8x128xf32>,
    return
  }
  func.func @transform_0(%arg0: i32, %arg1: i32) -> (i32, i32, i32) {
    %c0_i32 = arith.constant 0 : i32
    %c0_i32_0 = arith.constant 0 : i32
    return %arg0, %arg1, %c0_i32 : i32, i32, i32
  }
  func.func @transform_1(%arg0: i32, %arg1: i32) -> (i32, i32) {
    %c0_i32 = arith.constant 0 : i32
    %c0_i32_0 = arith.constant 0 : i32
    %c0_i32_1 = arith.constant 0 : i32
    return %c0_i32, %c0_i32_0 : i32, i32
  }
  func.func @transform_2(%arg0: i32, %arg1: i32) -> (i32, i32) {
    %c0_i32 = arith.constant 0 : i32
    %c0_i32_0 = arith.constant 0 : i32
    %c0_i32_1 = arith.constant 0 : i32
    return %c0_i32, %c0_i32_0 : i32, i32
  }
  func.func @transform_3(%arg0: i32, %arg1: i32) -> (i32, i32, i32) {
    %c0_i32 = arith.constant 0 : i32
    %c0_i32_0 = arith.constant 0 : i32
    return %arg0, %arg1, %c0_i32 : i32, i32, i32
  }
  func.func @transform_4(%arg0: i32, %arg1: i32) -> (i32, i32, i32) {
    %c0_i32 = arith.constant 0 : i32
    %c0_i32_0 = arith.constant 0 : i32
    return %arg0, %arg1, %c0_i32 : i32, i32, i32
  }
  func.func @transform_5(%arg0: i32, %arg1: i32) -> (i32, i32, i32) {
    %c0_i32 = arith.constant 0 : i32
    %c0_i32_0 = arith.constant 0 : i32
    return %arg0, %arg1, %c0_i32 : i32, i32, i32
  }
  func.func @transform_6(%arg0: i32, %arg1: i32) -> (i32, i32, i32, i32) {
    %c0_i32 = arith.constant 0 : i32
    %c0_i32_0 = arith.constant 0 : i32
    %c0_i32_1 = arith.constant 0 : i32
    return %arg0, %arg1, %c0_i32, %c0_i32_0 : i32, i32, i32, i32
  }
}

</mosaic_0001>

<llo_original>
// kernel: tpu_custom_call.1
$region0: #{tpu_custom_call.1}
  #allocation0 [shape = 'u32[]', space=smem, size = 0x4, offset = 0x4, fixed_abs, tag = 'smem constant byte address 0x4 - core index']
  #allocation1 [shape = 'u32[144,128]{1,0:T(1,128)}', space=vmem, size = 0x12000, scoped, tag = 'internal scratch']
  %s0 = inlined_call_operand.hbm [shape: f32[2,16,256], index: 0, kind: input, shape index: {}]
  %s1 = inlined_call_operand.hbm [shape: f32[256,128], index: 1, kind: input, shape index: {}]
  %s2 = inlined_call_operand.vmem [shape: f32[1,128], index: 2, kind: input, shape index: {}]
  %s3 = inlined_call_operand.vmem [shape: f32[2,16,128], index: 3, kind: input, shape index: {}]
  %s4 = inlined_call_operand.vmem [shape: f32[2,16,1], index: 4, kind: input, shape index: {}]
  %s5 = inlined_call_operand.hbm [shape: f32[2,16,128], index: 5, kind: output, shape index: {0}]
  %s6 = inlined_call_operand.hbm [shape: f32[2,1,8,128], index: 6, kind: output, shape index: {1}]
  %7 = xla_tuple %s5, %s6
  %s8 = sld [smem:[#allocation0]]
  $region69: #{tpu_custom_call.1} parent=0
    _
  %s10 = ssub.s32 1, %s8
  %s11 = scalar_select 0, %s10, %s8
  $region1: #{tpu_custom_call.1} parent=0
    #allocation2 [shape = 'u8[32768]{0}', space=vmem, size = 0x8000, scoped, tag = 'input window, operand 0']
    #allocation3 [shape = 's32[2]{0}', space=sflag, size = 0x8, scoped, tag = 'scoped memory for tpu_custom_call.1']
    #allocation4 [shape = 's32[2]{0}', space=sflag, size = 0x8, scoped, tag = 'scoped memory for tpu_custom_call.1']
    #allocation5 [shape = 'u8[131072]{0}', space=vmem, size = 0x20000, scoped, tag = 'input window, operand 1, single buffered']
    #allocation6 [shape = 's32[1]{0}', space=sflag, size = 0x4, scoped, tag = 'scoped memory for tpu_custom_call.1']
    #allocation7 [shape = 'u8[16384]{0}', space=vmem, size = 0x4000, scoped, tag = 'output window, operand 0']
    #allocation8 [shape = 'u8[8192]{0}', space=vmem, size = 0x2000, scoped, tag = 'output window, operand 1']
    #allocation9 [shape = 's32[2]{0}', space=sflag, size = 0x8, scoped, tag = 'scoped memory for tpu_custom_call.1']
    %12 = vsyncpa [#allocation3], 0
    %s13 = scalar_lea.sflag [#allocation3], 1
    %14 = vsyncpa %s13, 0
    %15 = vsyncpa [#allocation6], 0
    %16 = vsyncpa [#allocation4], 0
    %s17 = scalar_lea.sflag [#allocation4], 1
    %18 = vsyncpa %s17, 0
    %19 = vsyncpa [#allocation9], 0
    %s20 = scalar_lea.sflag [#allocation9], 1
    %21 = vsyncpa %s20, 0
    loop: start=0, step=1, limit=4
    $region2: #{tpu_custom_call.1} parent=1 // loop_pre_header
      _
    $region3: #{tpu_custom_call.1} parent=1 // loop_header
      %s23 = sphi 0, %s27
      %p24 = scmp.ge.s32.totalorder %s23, 4
      %s30 = sphi 0, %s42
      %s31 = sphi 0, %s38
      %s32 = sphi 0, %s30
      %s33 = sphi 0, %s31
      %s34 = sphi 0, %s32
      %s35 = sphi 0, %s33
      %s47 = sphi 0, %s49
      %s50 = sphi 0, %s47
      %s51 = sphi 0, %s50
      %s67 = sphi 0, %s51
      %s71 = sphi 0, %s71
      %s73 = sphi 0, %s71
      %s74 = sphi 0, %s73
      %s88 = sphi 0, %s74
      %s92 = sphi 0, %s92
      %s94 = sphi 0, %s92
      %s95 = sphi 0, %s94
      %s109 = sphi 0, %s95
      %s117 = sphi 0, %s119
      %s120 = sphi 0, %s117
      %s121 = sphi 0, %s120
      %s137 = sphi 0, %s121
      %s145 = sphi 0, %s147
      %s148 = sphi 0, %s145
      %s149 = sphi 0, %s148
      %s165 = sphi 0, %s149
      %s173 = sphi 0, %s175
      %s176 = sphi 0, %s173
      %s177 = sphi 0, %s176
      %s193 = sphi 0, %s177
      %s201 = sphi 0, %s203
      %s204 = sphi 0, %s201
      %s205 = sphi 0, %s204
      %s221 = sphi 0, %s205
    $region4: #{tpu_custom_call.1} parent=1 // loop_header_branch
      %26 = sbr.rel (%p24) target = $region8
    $region5: #{tpu_custom_call.1} parent=1 // loop_body
      %s28 = ssub.s32 %s23, 1
      %s29 = ssub.s32 %s23, 2
      %s36 = sadd.s32 1, %s31
      %p37 = scmp.ge.s32.totalorder %s36, 1
      %s38 = scalar_select %p37, 0, %s36
      %s39 = sadd.s32 1, %s30
      %s40 = scalar_select %p37, %s39, %s30
      %p41 = scmp.ge.s32.totalorder %s40, 2
      %s42 = scalar_select %p41, 0, %s40
      %s43 = ssub.s32 %s30, %s42
      %s44 = ssub.s32 %s31, %s38
      %s45 = sor.u32 %s43, %s44
      %p46 = scmp.eq.s32.totalorder %s45, 0
      %s48 = sadd.s32 %s47, 1
      %s49 = scalar_select %p46, %s47, %s48
      %p52 = pneg %p46
      %p53 = scmp.eq.s32.totalorder %s23, 1
      %p54 = por %p52, %p53
      %p55 = scmp.ne.s32.totalorder %s47, %s50
      %p56 = scmp.eq.s32.totalorder %s23, 0
      %p57 = por %p55, %p56
      %p58 = scmp.ne.s32.totalorder %s47, %s50
      %p59 = scmp.eq.s32.totalorder %s28, 1
      %p60 = por %p58, %p59
      %p61 = scmp.ne.s32.totalorder %s50, %s51
      %p62 = scmp.eq.s32.totalorder %s28, 0
      %p63 = por %p61, %p62
      %p64 = scmp.ne.s32.totalorder %s50, %s51
      %p65 = scmp.eq.s32.totalorder %s29, 1
      %p66 = por %p64, %p65
      %p68 = scmp.ne.s32.totalorder %s51, %s67
      %p69 = scmp.eq.s32.totalorder %s29, 0
      %p70 = por %p68, %p69
      %s72 = sadd.s32 %s71, 1
      %p75 = scmp.eq.s32.totalorder %s23, 1
      %p76 = scmp.ne.s32.totalorder %s71, %s73
      %p77 = scmp.eq.s32.totalorder %s23, 0
      %p78 = por %p76, %p77
      %p79 = scmp.ne.s32.totalorder %s71, %s73
      %p80 = scmp.eq.s32.totalorder %s28, 1
      %p81 = por %p79, %p80
      %p82 = scmp.ne.s32.totalorder %s73, %s74
      %p83 = scmp.eq.s32.totalorder %s28, 0
      %p84 = por %p82, %p83
      %p85 = scmp.ne.s32.totalorder %s73, %s74
      %p86 = scmp.eq.s32.totalorder %s29, 1
      %p87 = por %p85, %p86
      %p89 = scmp.ne.s32.totalorder %s74, %s88
      %p90 = scmp.eq.s32.totalorder %s29, 0
      %p91 = por %p89, %p90
      %s93 = sadd.s32 %s92, 1
      %p96 = scmp.eq.s32.totalorder %s23, 1
      %p97 = scmp.ne.s32.totalorder %s92, %s94
      %p98 = scmp.eq.s32.totalorder %s23, 0
      %p99 = por %p97, %p98
      %p100 = scmp.ne.s32.totalorder %s92, %s94
      %p101 = scmp.eq.s32.totalorder %s28, 1
      %p102 = por %p100, %p101
      %p103 = scmp.ne.s32.totalorder %s94, %s95
      %p104 = scmp.eq.s32.totalorder %s28, 0
      %p105 = por %p103, %p104
      %p106 = scmp.ne.s32.totalorder %s94, %s95
      %p107 = scmp.eq.s32.totalorder %s29, 1
      %p108 = por %p106, %p107
      %p110 = scmp.ne.s32.totalorder %s95, %s109
      %p111 = scmp.eq.s32.totalorder %s29, 0
      %p112 = por %p110, %p111
      %s113 = ssub.s32 %s30, %s42
      %s114 = ssub.s32 %s31, %s38
      %s115 = sor.u32 %s113, %s114
      %p116 = scmp.eq.s32.totalorder %s115, 0
      %s118 = sadd.s32 %s117, 1
      %s119 = scalar_select %p116, %s117, %s118
      %p122 = pneg %p116
      %p123 = scmp.eq.s32.totalorder %s23, 1
      %p124 = por %p122, %p123
      %p125 = scmp.ne.s32.totalorder %s117, %s120
      %p126 = scmp.eq.s32.totalorder %s23, 0
      %p127 = por %p125, %p126
      %p128 = scmp.ne.s32.totalorder %s117, %s120
      %p129 = scmp.eq.s32.totalorder %s28, 1
      %p130 = por %p128, %p129
      %p131 = scmp.ne.s32.totalorder %s120, %s121
      %p132 = scmp.eq.s32.totalorder %s28, 0
      %p133 = por %p131, %p132
      %p134 = scmp.ne.s32.totalorder %s120, %s121
      %p135 = scmp.eq.s32.totalorder %s29, 1
      %p136 = por %p134, %p135
      %p138 = scmp.ne.s32.totalorder %s121, %s137
      %p139 = scmp.eq.s32.totalorder %s29, 0
      %p140 = por %p138, %p139
      %s141 = ssub.s32 %s30, %s42
      %s142 = ssub.s32 %s31, %s38
      %s143 = sor.u32 %s141, %s142
      %p144 = scmp.eq.s32.totalorder %s143, 0
      %s146 = sadd.s32 %s145, 1
      %s147 = scalar_select %p144, %s145, %s146
      %p150 = pneg %p144
      %p151 = scmp.eq.s32.totalorder %s23, 1
      %p152 = por %p150, %p151
      %p153 = scmp.ne.s32.totalorder %s145, %s148
      %p154 = scmp.eq.s32.totalorder %s23, 0
      %p155 = por %p153, %p154
      %p156 = scmp.ne.s32.totalorder %s145, %s148
      %p157 = scmp.eq.s32.totalorder %s28, 1
      %p158 = por %p156, %p157
      %p159 = scmp.ne.s32.totalorder %s148, %s149
      %p160 = scmp.eq.s32.totalorder %s28, 0
      %p161 = por %p159, %p160
      %p162 = scmp.ne.s32.totalorder %s148, %s149
      %p163 = scmp.eq.s32.totalorder %s29, 1
      %p164 = por %p162, %p163
      %p166 = scmp.ne.s32.totalorder %s149, %s165
      %p167 = scmp.eq.s32.totalorder %s29, 0
      %p168 = por %p166, %p167
      %s169 = ssub.s32 %s30, %s42
      %s170 = ssub.s32 %s31, %s38
      %s171 = sor.u32 %s169, %s170
      %p172 = scmp.eq.s32.totalorder %s171, 0
      %s174 = sadd.s32 %s173, 1
      %s175 = scalar_select %p172, %s173, %s174
      %p178 = pneg %p172
      %p179 = scmp.eq.s32.totalorder %s23, 1
      %p180 = por %p178, %p179
      %p181 = scmp.ne.s32.totalorder %s173, %s176
      %p182 = scmp.eq.s32.totalorder %s23, 0
      %p183 = por %p181, %p182
      %p184 = scmp.ne.s32.totalorder %s173, %s176
      %p185 = scmp.eq.s32.totalorder %s28, 1
      %p186 = por %p184, %p185
      %p187 = scmp.ne.s32.totalorder %s176, %s177
      %p188 = scmp.eq.s32.totalorder %s28, 0
      %p189 = por %p187, %p188
      %p190 = scmp.ne.s32.totalorder %s176, %s177
      %p191 = scmp.eq.s32.totalorder %s29, 1
      %p192 = por %p190, %p191
      %p194 = scmp.ne.s32.totalorder %s177, %s193
      %p195 = scmp.eq.s32.totalorder %s29, 0
      %p196 = por %p194, %p195
      %s197 = ssub.s32 %s30, %s42
      %s198 = ssub.s32 %s31, %s38
      %s199 = sor.u32 %s197, %s198
      %p200 = scmp.eq.s32.totalorder %s199, 0
      %s202 = sadd.s32 %s201, 1
      %s203 = scalar_select %p200, %s201, %s202
      %p206 = pneg %p200
      %p207 = scmp.eq.s32.totalorder %s23, 1
      %p208 = por %p206, %p207
      %p209 = scmp.ne.s32.totalorder %s201, %s204
      %p210 = scmp.eq.s32.totalorder %s23, 0
      %p211 = por %p209, %p210
      %p212 = scmp.ne.s32.totalorder %s201, %s204
      %p213 = scmp.eq.s32.totalorder %s28, 1
      %p214 = por %p212, %p213
      %p215 = scmp.ne.s32.totalorder %s204, %s205
      %p216 = scmp.eq.s32.totalorder %s28, 0
      %p217 = por %p215, %p216
      %p218 = scmp.ne.s32.totalorder %s204, %s205
      %p219 = scmp.eq.s32.totalorder %s29, 1
      %p220 = por %p218, %p219
      %p222 = scmp.ne.s32.totalorder %s205, %s221
      %p223 = scmp.eq.s32.totalorder %s29, 0
      %p224 = por %p222, %p223
      %p225 = scmp.le.s32.totalorder 1, %s23
      %p226 = scmp.lt.s32.totalorder %s23, 3
      %p227 = pnand %p225, %p226
      %p228 = pneg %p227
      // Predicated region
      $region9: #{tpu_custom_call.1} parent=5 // pred_check
        _
      $region10: #{tpu_custom_call.1} parent=5 // pred_check_branch
        %230 = sbr.rel (%p227) target = $region12
      $region11: #{tpu_custom_call.1} parent=5 // pred_region
        %s231 = ssub.s32 %s23, 1
        // Predicated region
        $region13: #{tpu_custom_call.1} parent=11 // pred_check
          %p232 = pneg %p84
        $region14: #{tpu_custom_call.1} parent=11 // pred_check_branch
          %234 = sbr.rel (%p232) target = $region16
        $region15: #{tpu_custom_call.1} parent=11 // pred_region
          %s236 = ssub.s32 4096, 4096
          %237 = vsyncadd [#allocation6], %s236
          %s238 = sshll.u32 [#allocation5], 4
          %s239 = int_to_ptr.vmem [resolvable:$true] %s238
          %244 = dma.hbm_to_vmem [thread:$0]  %s1, 4096, %s239, [#allocation6], 128, 128, 8
        $region16: #{tpu_custom_call.1} parent=11 // pred_fallthru
          _
        // Predicated region
        $region17: #{tpu_custom_call.1} parent=11 // pred_check
          %p245 = pneg %p105
        $region18: #{tpu_custom_call.1} parent=11 // pred_check_branch
          %247 = sbr.rel (%p245) target = $region20
        $region19: #{tpu_custom_call.1} parent=11 // pred_region
          _
        $region20: #{tpu_custom_call.1} parent=11 // pred_fallthru
          _
      $region12: #{tpu_custom_call.1} parent=5 // pred_fallthru
        _
      %p248 = scmp.lt.s32.totalorder %s23, 2
      // Predicated region
      $region21: #{tpu_custom_call.1} parent=5 // pred_check
        %p249 = pneg %p248
      $region22: #{tpu_custom_call.1} parent=5 // pred_check_branch
        %251 = sbr.rel (%p249) target = $region24
      $region23: #{tpu_custom_call.1} parent=5 // pred_region
        // Predicated region
        $region25: #{tpu_custom_call.1} parent=23 // pred_check
          %p252 = pneg %p57
        $region26: #{tpu_custom_call.1} parent=23 // pred_check_branch
          %254 = sbr.rel (%p252) target = $region28
        $region27: #{tpu_custom_call.1} parent=23 // pred_region
          %s255 = sand.u32 %s47, 1
          %s256 = scalar_lea.sflag [#allocation3], %s255
          %s257 = sand.u32 %s47, 1
          %s258 = smul.addr %s257, 32
          %s259 = scalar_lea.vmem [#allocation2], %s258
          %s260 = smul.u32 2, %s31
          %s262 = ssub.s32 512, 512
          %263 = vsyncadd %s256, %s262
          %s264 = smul.addr %s260, 2
          %s265 = smul.addr %s30, 4
          %s266 = sadd.s32 %s264, %s265
          %s267 = smul.addr %s266, 128
          %s268 = scalar_lea.hbm %s0, %s267
          %s269 = sshll.u32 %s259, 4
          %s270 = int_to_ptr.vmem [resolvable:$true] %s269
          %275 = dma.hbm_to_vmem [thread:$0]  %s268, 512, %s270, %s256, 256, 256, 16
        $region28: #{tpu_custom_call.1} parent=23 // pred_fallthru
          _
        // Predicated region
        $region29: #{tpu_custom_call.1} parent=23 // pred_check
          %p276 = pneg %p127
        $region30: #{tpu_custom_call.1} parent=23 // pred_check_branch
          %278 = sbr.rel (%p276) target = $region32
        $region31: #{tpu_custom_call.1} parent=23 // pred_region
          %s279 = smul.u32 2, %s31
          %p280 = scmp.lt.s32.totalorder %s30, 1
          %s281 = scalar_select %p280, %s30, 1
          %p282 = scmp.lt.s32.totalorder %s279, 1
          %s283 = scalar_select %p282, %s279, 1
          %s284 = smul.addr %s281, 2
          %s285 = sadd.s32 %s283, %s284
          %s286 = smul.addr %s285, 8
          %s287 = scalar_lea.vmem %s3, %s286
          %s288 = smul.u32 2, %s31
        $region32: #{tpu_custom_call.1} parent=23 // pred_fallthru
          _
        // Predicated region
        $region33: #{tpu_custom_call.1} parent=23 // pred_check
          %p289 = pneg %p155
        $region34: #{tpu_custom_call.1} parent=23 // pred_check_branch
          %291 = sbr.rel (%p289) target = $region36
        $region35: #{tpu_custom_call.1} parent=23 // pred_region
          %s292 = smul.u32 2, %s31
          %p293 = scmp.lt.s32.totalorder %s30, 1
          %s294 = scalar_select %p293, %s30, 1
          %p295 = scmp.lt.s32.totalorder %s292, 1
          %s296 = scalar_select %p295, %s292, 1
          %s297 = smul.addr %s294, 2
          %s298 = sadd.s32 %s296, %s297
          %s299 = smul.addr %s298, 8
          %s300 = scalar_lea.vmem %s4, %s299
          %s301 = smul.u32 2, %s31
        $region36: #{tpu_custom_call.1} parent=23 // pred_fallthru
          _
      $region24: #{tpu_custom_call.1} parent=5 // pred_fallthru
        _
      %p302 = scmp.le.s32.totalorder 1, %s23
      %p303 = scmp.lt.s32.totalorder %s23, 3
      %p304 = pnand %p302, %p303
      %p305 = pneg %p304
      // Predicated region
      $region37: #{tpu_custom_call.1} parent=5 // pred_check
        _
      $region38: #{tpu_custom_call.1} parent=5 // pred_check_branch
        %307 = sbr.rel (%p304) target = $region40
      $region39: #{tpu_custom_call.1} parent=5 // pred_region
        %s308 = ssub.s32 %s23, 1
        %s309 = sand.u32 %s50, 1
        %s310 = scalar_lea.sflag [#allocation3], %s309
        %s311 = sand.u32 %s50, 1
        %s312 = smul.addr %s311, 32
        %s313 = scalar_lea.vmem [#allocation2], %s312
        // Predicated region
        $region41: #{tpu_custom_call.1} parent=39 // pred_check
          %p314 = pneg %p63
        $region42: #{tpu_custom_call.1} parent=39 // pred_check_branch
          %316 = sbr.rel (%p314) target = $region44
        $region43: #{tpu_custom_call.1} parent=39 // pred_region
          %317 = dma.done %s310, 512
        $region44: #{tpu_custom_call.1} parent=39 // pred_fallthru
          _
        // Predicated region
        $region45: #{tpu_custom_call.1} parent=39 // pred_check
          %p318 = pneg %p84
        $region46: #{tpu_custom_call.1} parent=39 // pred_check_branch
          %320 = sbr.rel (%p318) target = $region48
        $region47: #{tpu_custom_call.1} parent=39 // pred_region
          %321 = dma.done [#allocation6], 4096
        $region48: #{tpu_custom_call.1} parent=39 // pred_fallthru
          _
        %s322 = sand.u32 %s50, 1
        %s323 = scalar_lea.sflag [#allocation3], %s322
        %s324 = sand.u32 %s50, 1
        %s325 = smul.addr %s324, 32
        %s326 = scalar_lea.vmem [#allocation2], %s325
        %p327 = pneg %p63
        %p328 = pneg %p60
        %p329 = pneg %p84
        %p330 = pneg %p81
        %p331 = pneg %p105
        %p332 = pneg %p102
        %s333 = smul.u32 2, %s33
        %p334 = scmp.lt.s32.totalorder %s32, 1
        %s335 = scalar_select %p334, %s32, 1
        %p336 = scmp.lt.s32.totalorder %s333, 1
        %s337 = scalar_select %p336, %s333, 1
        %s338 = smul.addr %s335, 2
        %s339 = sadd.s32 %s337, %s338
        %s340 = smul.addr %s339, 8
        %s341 = scalar_lea.vmem %s3, %s340
        %p342 = pneg %p133
        %p343 = pneg %p130
        %s344 = smul.u32 2, %s33
        %p345 = scmp.lt.s32.totalorder %s32, 1
        %s346 = scalar_select %p345, %s32, 1
        %p347 = scmp.lt.s32.totalorder %s344, 1
        %s348 = scalar_select %p347, %s344, 1
        %s349 = smul.addr %s346, 2
        %s350 = sadd.s32 %s348, %s349
        %s351 = smul.addr %s350, 8
        %s352 = scalar_lea.vmem %s4, %s351
        %p353 = pneg %p161
        %p354 = pneg %p158
        %p355 = pneg %p189
        %p356 = pneg %p186
        %s357 = sand.u32 %s176, 1
        %s358 = scalar_lea.sflag [#allocation4], %s357
        %s359 = sand.u32 %s176, 1
        %s360 = smul.addr %s359, 16
        %s361 = scalar_lea.vmem [#allocation7], %s360
        %p362 = pneg %p217
        %p363 = pneg %p214
        %s364 = sand.u32 %s204, 1
        %s365 = scalar_lea.sflag [#allocation9], %s364
        %s366 = sand.u32 %s204, 1
        %s367 = smul.addr %s366, 8
        %s368 = scalar_lea.vmem [#allocation8], %s367
        %s369 = smul.u32 2, %s33
        %s370 = smul.u32 2, %s33
        %p371 = scmp.lt.s32.totalorder %s32, 1
        %s372 = scalar_select %p371, %s32, 1
        %p373 = scmp.lt.s32.totalorder %s370, 1
        %s374 = scalar_select %p373, %s370, 1
        %s375 = smul.addr %s372, 2
        %s376 = sadd.s32 %s374, %s375
        %s377 = smul.addr %s376, 8
        %s378 = scalar_lea.vmem %s3, %s377
        %s379 = smul.u32 2, %s33
        %s380 = smul.u32 2, %s33
        %p381 = scmp.lt.s32.totalorder %s32, 1
        %s382 = scalar_select %p381, %s32, 1
        %p383 = scmp.lt.s32.totalorder %s380, 1
        %s384 = scalar_select %p383, %s380, 1
        %s385 = smul.addr %s382, 2
        %s386 = sadd.s32 %s384, %s385
        %s387 = smul.addr %s386, 8
        %s388 = scalar_lea.vmem %s4, %s387
        %s389 = smul.u32 2, %s33
        %s390 = smul.u32 2, %s33
        %v391 = vld [vmem:[%s313] sm:$0xff]
        %v392 = vld [vmem:[%s313 + $0x8] sm:$0xff]
        %v393 = vld [vmem:[%s313 + $0x10] sm:$0xff]
        %v394 = vld [vmem:[%s313 + $0x18] sm:$0xff]
        %v395 = vld [vmem:[#allocation5] sm:$0xff]
        %v396 = vld [vmem:[#allocation5 + $0x8] sm:$0xff]
        %v397 = vld [vmem:[#allocation5 + $0x10] sm:$0xff]
        %v398 = vld [vmem:[#allocation5 + $0x18] sm:$0xff]
        %v399 = vld [vmem:[#allocation5 + $0x20] sm:$0xff]
        %v400 = vld [vmem:[#allocation5 + $0x28] sm:$0xff]
        %v401 = vld [vmem:[#allocation5 + $0x30] sm:$0xff]
        %v402 = vld [vmem:[#allocation5 + $0x38] sm:$0xff]
        %v403 = vld [vmem:[#allocation5 + $0x40] sm:$0xff]
        %v404 = vld [vmem:[#allocation5 + $0x48] sm:$0xff]
        %v405 = vld [vmem:[#allocation5 + $0x50] sm:$0xff]
        %v406 = vld [vmem:[#allocation5 + $0x58] sm:$0xff]
        %v407 = vld [vmem:[#allocation5 + $0x60] sm:$0xff]
        %v408 = vld [vmem:[#allocation5 + $0x68] sm:$0xff]
        %v409 = vld [vmem:[#allocation5 + $0x70] sm:$0xff]
        %v410 = vld [vmem:[#allocation5 + $0x78] sm:$0xff]
        %v411 = vld [vmem:[#allocation5 + $0x80] sm:$0xff]
        %v412 = vld [vmem:[#allocation5 + $0x88] sm:$0xff]
        %v413 = vld [vmem:[#allocation5 + $0x90] sm:$0xff]
        %v414 = vld [vmem:[#allocation5 + $0x98] sm:$0xff]
        %v415 = vld [vmem:[#allocation5 + $0xa0] sm:$0xff]
        %v416 = vld [vmem:[#allocation5 + $0xa8] sm:$0xff]
        %v417 = vld [vmem:[#allocation5 + $0xb0] sm:$0xff]
        %v418 = vld [vmem:[#allocation5 + $0xb8] sm:$0xff]
        %v419 = vld [vmem:[#allocation5 + $0xc0] sm:$0xff]
        %v420 = vld [vmem:[#allocation5 + $0xc8] sm:$0xff]
        %v421 = vld [vmem:[#allocation5 + $0xd0] sm:$0xff]
        %v422 = vld [vmem:[#allocation5 + $0xd8] sm:$0xff]
        %v423 = vld [vmem:[#allocation5 + $0xe0] sm:$0xff]
        %v424 = vld [vmem:[#allocation5 + $0xe8] sm:$0xff]
        %v425 = vld [vmem:[#allocation5 + $0xf0] sm:$0xff]
        %v426 = vld [vmem:[#allocation5 + $0xf8] sm:$0xff]
        %v427 = vld [vmem:[%s2] sm:$0x1]
        %v429 = vlaneseq
        %v430 = vshrl.u32 %v429, 7
        %v431 = vsub.s32 0, %v430
        %v432 = vrot.slane %v427, %v431
        %434 = vmatprep.subr.mxu0 0.0
        %435 = vmatpush1.msra.mxu0 %v410
        %436 = vmatprep.subr.mxu0 0.0
        %437 = vmatpush1.msra.mxu0 %v409
        %438 = vmatprep.subr.mxu0 0.0
        %439 = vmatpush1.msra.mxu0 %v408
        %440 = vmatprep.subr.mxu0 0.0
        %441 = vmatpush1.msra.mxu0 %v407
        %442 = vmatprep.subr.mxu0 0.0
        %443 = vmatpush1.msra.mxu0 %v406
        %444 = vmatprep.subr.mxu0 0.0
        %445 = vmatpush1.msra.mxu0 %v405
        %446 = vmatprep.subr.mxu0 0.0
        %447 = vmatpush1.msra.mxu0 %v404
        %448 = vmatprep.subr.mxu0 0.0
        %449 = vmatpush1.msra.mxu0 %v403
        %450 = vmatprep.subr.mxu0 0.0
        %451 = vmatpush1.msra.mxu0 %v402
        %452 = vmatprep.subr.mxu0 0.0
        %453 = vmatpush1.msra.mxu0 %v401
        %454 = vmatprep.subr.mxu0 0.0
        %455 = vmatpush1.msra.mxu0 %v400
        %456 = vmatprep.subr.mxu0 0.0
        %457 = vmatpush1.msra.mxu0 %v399
        %458 = vmatprep.subr.mxu0 0.0
        %459 = vmatpush1.msra.mxu0 %v398
        %460 = vmatprep.subr.mxu0 0.0
        %461 = vmatpush1.msra.mxu0 %v397
        %462 = vmatprep.subr.mxu0 0.0
        %463 = vmatpush1.msra.mxu0 %v396
        %464 = vmatprep.subr.mxu0 0.0
        %465 = vmatpush1.msra.mxu0 %v395
        %466 = vmatprep.subr.mxu0 0.0
        %467 = vmatpush2.msra.mxu0 %v426
        %468 = vmatprep.subr.mxu0 0.0
        %469 = vmatpush2.msra.mxu0 %v425
        %470 = vmatprep.subr.mxu0 0.0
        %471 = vmatpush2.msra.mxu0 %v424
        %472 = vmatprep.subr.mxu0 0.0
        %473 = vmatpush2.msra.mxu0 %v423
        %474 = vmatprep.subr.mxu0 0.0
        %475 = vmatpush2.msra.mxu0 %v422
        %476 = vmatprep.subr.mxu0 0.0
        %477 = vmatpush2.msra.mxu0 %v421
        %478 = vmatprep.subr.mxu0 0.0
        %479 = vmatpush2.msra.mxu0 %v420
        %480 = vmatprep.subr.mxu0 0.0
        %481 = vmatpush2.msra.mxu0 %v419
        %482 = vmatprep.subr.mxu0 0.0
        %483 = vmatpush2.msra.mxu0 %v418
        %484 = vmatprep.subr.mxu0 0.0
        %485 = vmatpush2.msra.mxu0 %v417
        %486 = vmatprep.subr.mxu0 0.0
        %487 = vmatpush2.msra.mxu0 %v416
        %488 = vmatprep.subr.mxu0 0.0
        %489 = vmatpush2.msra.mxu0 %v415
        %490 = vmatprep.subr.mxu0 0.0
        %491 = vmatpush2.msra.mxu0 %v414
        %492 = vmatprep.subr.mxu0 0.0
        %493 = vmatpush2.msra.mxu0 %v413
        %494 = vmatprep.subr.mxu0 0.0
        %495 = vmatpush2.msra.mxu0 %v412
        %496 = vmatprep.subr.mxu0 0.0
        %497 = vmatpush2.msra.mxu0 %v411
        %498 = vmatprep.mubr.f32.mxu0 %v392
        %499 = vmatmul.mubr.f32.gmra.mxu0 %v391
        %v500 = vpop.f32.mrf.mxu0
        %v501 = vadd.f32 %v432, %v500
        %v502 = vpop.f32.mrf.mxu0
        %503 = vmatprep.mubr.f32.mxu0 %v394
        %504 = vmatmul.mubr.f32.gmra.mxu0 %v393
        %v505 = vpop.f32.mrf.mxu0
        %v506 = vadd.f32 %v432, %v505
        %v507 = vpop.f32.mrf.mxu0
        %508 = vdwg.mxu0
        %509 = vst [vmem:[%s361] sm:$0xff] %v501
        %510 = vst [vmem:[%s361 + $0x8] sm:$0xff] %v506
        %v511 = vld [vmem:[%s378] sm:$0xff]
        %v512 = vld [vmem:[%s378 + $0x8] sm:$0xff]
        %v513 = vld [vmem:[%s388] sm:$0xff]
        %v514 = vld [vmem:[%s388 + $0x8] sm:$0xff]
        %515 = vmax.xlane.f32.xlu0 %v501
        %v516 = vpop.xlane.xlu0 %515
        %517 = vmax.xlane.f32.xlu0 %v506
        %v518 = vpop.xlane.xlu0 %517
        %v519 = vsub.f32 %v501, %v516
        %v520 = vsub.f32 %v506, %v518
        %v521 = vmul.f32 %v519, 1.442695
        %v522 = vpow.pop %v521
        %v523 = vmul.f32 %v520, 1.442695
        %v524 = vpow.pop %v523
        %525 = vadd.xlane.f32.xlu0 %v522
        %v526 = vpop.xlane.xlu0 %525
        %527 = vadd.xlane.f32.xlu0 %v524
        %v528 = vpop.xlane.xlu0 %527
        %v529 = vlog2.pop %v526
        %v530 = vmul.f32 %v529, 0.6931472
        %v531 = vlog2.pop %v528
        %v532 = vmul.f32 %v531, 0.6931472
        %vm533 = vcmp.gt.f32.partialorder %v511, 0.0
        %vm534 = vcmp.gt.f32.partialorder %v512, 0.0
        %v535 = vsel %vm533, %v511, 1.0
        %v536 = vsel %vm534, %v512, 1.0
        %v537 = vlog2.pop %v535
        %v538 = vmul.f32 %v537, 0.6931472
        %v539 = vlog2.pop %v536
        %v540 = vmul.f32 %v539, 0.6931472
        %v541 = vsub.f32 %v538, %v519
        %v542 = vsub.f32 %v540, %v520
        %v543 = vmul.f32 %v511, %v541
        %v544 = vmul.f32 %v512, %v542
        %v545 = vsel %vm533, %v543, 0.0
        %v546 = vsel %vm534, %v544, 0.0
        %547 = vadd.xlane.f32.xlu0 %v545
        %v548 = vpop.xlane.xlu0 %547
        %549 = vadd.xlane.f32.xlu0 %v546
        %v550 = vpop.xlane.xlu0 %549
        %551 = vadd.xlane.f32.xlu0 %v511
        %v552 = vpop.xlane.xlu0 %551
        %553 = vadd.xlane.f32.xlu0 %v512
        %v554 = vpop.xlane.xlu0 %553
        %v555 = vmul.f32 %v530, %v552
        %v556 = vmul.f32 %v532, %v554
        %v557 = vadd.f32 %v548, %v555
        %v558 = vadd.f32 %v550, %v556
        %v559 = vmul.f32 %v557, %v513
        %v560 = vmul.f32 %v558, %v514
        %vm561 = vcmask 7168
        %v562 = vsel %vm561, %v559, 0.0
        %v563 = vsel %vm561, %v560, 0.0
        %v564 = vadd.f32 %v562, %v563
        %v565 = vrot.slane %v564, 4
        %v566 = vadd.f32 %v564, %v565
        %v567 = vrot.slane %v566, 2
        %v568 = vadd.f32 %v566, %v567
        %v569 = vrot.slane %v568, 1
        %v570 = vadd.f32 %v568, %v569
        %v571 = vlaneseq
        %v572 = vand.u32 %v571, 127
        %vm573 = vcmp.eq.f32.partialorder %v501, %v516
        %vm574 = vcmp.eq.f32.partialorder %v506, %v518
        %v575 = vsel %vm573, %v572, 1073741824
        %v576 = vsel %vm574, %v572, 1073741824
        %v577 = vand.u32 %v575, 65535
        %v578 = vshra.s32 %v575, 16
        %v579 = vcvt.s32.f32 %v577
        %v580 = vcvt.s32.f32 %v578
        %581 = vmin.xlane.f32.xlu0 %v580
        %v582 = vpop.xlane.xlu0 %581
        %vm583 = vcmp.eq.f32.partialorder %v580, %v582
        %v584 = vsel %vm583, %v579, inf
        %585 = vmin.xlane.f32.xlu0 %v584
        %v586 = vpop.xlane.xlu0 %585
        %v587 = vcvt.f32.s32 %v586
        %v588 = vcvt.f32.s32 %v582
        %v589 = vshll.u32 %v588, 16
        %v590 = vadd.s32 %v589, %v587
        %v591 = vand.u32 %v576, 65535
        %v592 = vshra.s32 %v576, 16
        %v593 = vcvt.s32.f32 %v591
        %v594 = vcvt.s32.f32 %v592
        %595 = vmin.xlane.f32.xlu0 %v594
        %v596 = vpop.xlane.xlu0 %595
        %vm597 = vcmp.eq.f32.partialorder %v594, %v596
        %v598 = vsel %vm597, %v593, inf
        %599 = vmin.xlane.f32.xlu0 %v598
        %v600 = vpop.xlane.xlu0 %599
        %v601 = vcvt.f32.s32 %v600
        %v602 = vcvt.f32.s32 %v596
        %v603 = vshll.u32 %v602, 16
        %v604 = vadd.s32 %v603, %v601
        %605 = vmax.xlane.f32.xlu0 %v511
        %v606 = vpop.xlane.xlu0 %605
        %607 = vmax.xlane.f32.xlu0 %v512
        %v608 = vpop.xlane.xlu0 %607
        %vm609 = vcmp.eq.f32.partialorder %v511, %v606
        %vm610 = vcmp.eq.f32.partialorder %v512, %v608
        %v611 = vsel %vm609, %v572, 1073741824
        %v612 = vsel %vm610, %v572, 1073741824
        %v613 = vand.u32 %v611, 65535
        %v614 = vshra.s32 %v611, 16
        %v615 = vcvt.s32.f32 %v613
        %v616 = vcvt.s32.f32 %v614
        %617 = vmin.xlane.f32.xlu0 %v616
        %v618 = vpop.xlane.xlu0 %617
        %vm619 = vcmp.eq.f32.partialorder %v616, %v618
        %v620 = vsel %vm619, %v615, inf
        %621 = vmin.xlane.f32.xlu0 %v620
        %v622 = vpop.xlane.xlu0 %621
        %v623 = vcvt.f32.s32 %v622
        %v624 = vcvt.f32.s32 %v618
        %v625 = vshll.u32 %v624, 16
        %v626 = vadd.s32 %v625, %v623
        %v627 = vand.u32 %v612, 65535
        %v628 = vshra.s32 %v612, 16
        %v629 = vcvt.s32.f32 %v627
        %v630 = vcvt.s32.f32 %v628
        %631 = vmin.xlane.f32.xlu0 %v630
        %v632 = vpop.xlane.xlu0 %631
        %vm633 = vcmp.eq.f32.partialorder %v630, %v632
        %v634 = vsel %vm633, %v629, inf
        %635 = vmin.xlane.f32.xlu0 %v634
        %v636 = vpop.xlane.xlu0 %635
        %v637 = vcvt.f32.s32 %v636
        %v638 = vcvt.f32.s32 %v632
        %v639 = vshll.u32 %v638, 16
        %v640 = vadd.s32 %v639, %v637
        %vm641 = vcmp.eq.s32.totalorder %v572, %v590
        %vm642 = vcmp.eq.s32.totalorder %v572, %v604
        %v643 = vsel %vm641, %v511, 0.0
        %v644 = vsel %vm642, %v512, 0.0
        %645 = vadd.xlane.f32.xlu0 %v643
        %v646 = vpop.xlane.xlu0 %645
        %647 = vadd.xlane.f32.xlu0 %v644
        %v648 = vpop.xlane.xlu0 %647
        %vm649 = vcmp.eq.f32.partialorder %v513, 0.0
        %vm650 = vcmp.eq.f32.partialorder %v514, 0.0
        %vm651 = vcmp.eq.s32.totalorder %v590, %v626
        %vm652 = vcmp.eq.s32.totalorder %v604, %v640
        %vm653 = vmor %vm651, %vm649
        %vm654 = vmor %vm652, %vm650
        %vm655 = vcmp.gt.f32.partialorder %v646, 0.0
        %vm656 = vcmp.gt.f32.partialorder %v648, 0.0
        %vm657 = vmor %vm655, %vm649
        %vm658 = vmor %vm656, %vm650
        %v659 = vsel %vm653, 1, 0
        %v660 = vsel %vm654, 1, 0
        %v661 = vcvt.s32.f32 %v659
        %v662 = vcvt.s32.f32 %v660
        %v663 = vsel %vm561, %v661, inf
        %v664 = vsel %vm561, %v662, inf
        %v665 = vmin.f32 %v663, %v664
        %v666 = vrot.slane %v665, 4
        %v667 = vmin.f32 %v665, %v666
        %v668 = vrot.slane %v667, 2
        %v669 = vmin.f32 %v667, %v668
        %v670 = vrot.slane %v669, 1
        %v671 = vmin.f32 %v669, %v670
        %v672 = vsel %vm657, 1, 0
        %v673 = vsel %vm658, 1, 0
        %v674 = vcvt.s32.f32 %v672
        %v675 = vcvt.s32.f32 %v673
        %v676 = vsel %vm561, %v674, inf
        %v677 = vsel %vm561, %v675, inf
        %v678 = vmin.f32 %v676, %v677
        %v679 = vrot.slane %v678, 4
        %v680 = vmin.f32 %v678, %v679
        %v681 = vrot.slane %v680, 2
        %v682 = vmin.f32 %v680, %v681
        %v683 = vrot.slane %v682, 1
        %v684 = vmin.f32 %v682, %v683
        %vm685 = vcmp.eq.s32.totalorder %v572, 0
        %vm686 = vcmp.eq.s32.totalorder %v572, 1
        %vm687 = vcmp.eq.s32.totalorder %v572, 2
        %689 = vset.pattern.permute.xlu0 0
        %690 = vperm.xlu0 %689, %v684
        %v691 = vpop.permute.xlu0 %690
        %v693 = vsel %vm687, %v691, 0.0
        %695 = vset.pattern.permute.xlu0 0
        %696 = vperm.xlu0 %695, %v671
        %v697 = vpop.permute.xlu0 %696
        %v699 = vsel %vm686, %v697, %v693
        %701 = vset.pattern.permute.xlu0 0
        %702 = vperm.xlu0 %701, %v570
        %v703 = vpop.permute.xlu0 %702
        %v705 = vsel %vm685, %v703, %v699
        %706 = vst [vmem:[%s368] sm:$0xff] %v705
        %s707 = sand.u32 %s176, 1
        %s708 = scalar_lea.sflag [#allocation4], %s707
        %s709 = sand.u32 %s176, 1
        %s710 = smul.addr %s709, 16
        %s711 = scalar_lea.vmem [#allocation7], %s710
        %s712 = sand.u32 %s204, 1
        %s713 = scalar_lea.sflag [#allocation9], %s712
        %s714 = sand.u32 %s204, 1
        %s715 = smul.addr %s714, 8
        %s716 = scalar_lea.vmem [#allocation8], %s715
        // Predicated region
        $region49: #{tpu_custom_call.1} parent=39 // pred_check
          %p717 = pneg %p186
        $region50: #{tpu_custom_call.1} parent=39 // pred_check_branch
          %719 = sbr.rel (%p717) target = $region52
        $region51: #{tpu_custom_call.1} parent=39 // pred_region
          %s720 = smul.u32 2, %s33
          %s722 = ssub.s32 256, 256
          %723 = vsyncadd %s708, %s722
          %s724 = smul.addr %s32, 2
          %s725 = sadd.s32 %s720, %s724
          %s726 = smul.addr %s725, 128
          %s727 = scalar_lea.hbm %s5, %s726
          %s728 = sshll.u32 %s711, 4
          %s729 = int_to_ptr.vmem [resolvable:$true] %s728
          %734 = dma.vmem_to_hbm [thread:$0]  %s729, 256, %s727, %s708, 128, 128, 8
        $region52: #{tpu_custom_call.1} parent=39 // pred_fallthru
          _
        // Predicated region
        $region53: #{tpu_custom_call.1} parent=39 // pred_check
          %p735 = pneg %p214
        $region54: #{tpu_custom_call.1} parent=39 // pred_check_branch
          %737 = sbr.rel (%p735) target = $region56
        $region55: #{tpu_custom_call.1} parent=39 // pred_region
          %s739 = ssub.s32 128, 128
          %740 = vsyncadd %s713, %s739
          %s741 = sadd.s32 %s33, %s32
          %s742 = smul.addr %s741, 128
          %s743 = scalar_lea.hbm %s6, %s742
          %s745 = sshll.u32 %s716, 4
          %s746 = int_to_ptr.vmem [resolvable:$true] %s745
          %748 = dma.vmem_to_hbm [thread:$0]  %s746, 128, %s743, %s713
        $region56: #{tpu_custom_call.1} parent=39 // pred_fallthru
          _
      $region40: #{tpu_custom_call.1} parent=5 // pred_fallthru
        _
      %p749 = scmp.le.s32.totalorder 2, %s23
      // Predicated region
      $region57: #{tpu_custom_call.1} parent=5 // pred_check
        %p750 = pneg %p749
      $region58: #{tpu_custom_call.1} parent=5 // pred_check_branch
        %752 = sbr.rel (%p750) target = $region60
      $region59: #{tpu_custom_call.1} parent=5 // pred_region
        %s753 = ssub.s32 %s23, 2
        // Predicated region
        $region61: #{tpu_custom_call.1} parent=59 // pred_check
          %p754 = pneg %p192
        $region62: #{tpu_custom_call.1} parent=59 // pred_check_branch
          %756 = sbr.rel (%p754) target = $region64
        $region63: #{tpu_custom_call.1} parent=59 // pred_region
          %s757 = sand.u32 %s177, 1
          %s758 = scalar_lea.sflag [#allocation4], %s757
          %s759 = sand.u32 %s177, 1
          %s760 = smul.addr %s759, 16
          %s761 = scalar_lea.vmem [#allocation7], %s760
          %762 = dma.done %s758, 256
        $region64: #{tpu_custom_call.1} parent=59 // pred_fallthru
          _
        // Predicated region
        $region65: #{tpu_custom_call.1} parent=59 // pred_check
          %p763 = pneg %p220
        $region66: #{tpu_custom_call.1} parent=59 // pred_check_branch
          %765 = sbr.rel (%p763) target = $region68
        $region67: #{tpu_custom_call.1} parent=59 // pred_region
          %s766 = sand.u32 %s205, 1
          %s767 = scalar_lea.sflag [#allocation9], %s766
          %s768 = sand.u32 %s205, 1
          %s769 = smul.addr %s768, 8
          %s770 = scalar_lea.vmem [#allocation8], %s769
          %771 = dma.done %s767, 128
        $region68: #{tpu_custom_call.1} parent=59 // pred_fallthru
          _
      $region60: #{tpu_custom_call.1} parent=5 // pred_fallthru
        _
    $region6: #{tpu_custom_call.1} parent=1 // loop_footer
      %s27 = sadd.s32 1, %s23
    $region7: #{tpu_custom_call.1} parent=1 // loop_footer_branch
      %22 = sbr.rel target = $region3
    $region8: #{tpu_custom_call.1} parent=1 // loop_exit
      _
    %772 = vsyncpa [#allocation3], 1
    %s773 = scalar_lea.sflag [#allocation3], 1
    %774 = vsyncpa %s773, 1
    %775 = vsyncpa [#allocation6], 1
    %776 = vsyncpa [#allocation4], 1
    %s777 = scalar_lea.sflag [#allocation4], 1
    %778 = vsyncpa %s777, 1
    %779 = vsyncpa [#allocation9], 1
    %s780 = scalar_lea.sflag [#allocation9], 1
    %781 = vsyncpa %s780, 1

</llo_original>
